<compile_context>
chip_gen: v6e
topology: v6e:2x2x1
jax: 0.10.0
libtpu: 0.0.40
codegen_flags: <defaults>
</compile_context>

<pallas_src>
import functools

import jax
import jax.numpy as jnp
from jax.experimental import pallas as pl
from jax.experimental.pallas import tpu as pltpu

_LANE = 128
_SUBLANE = 8


def _ce_vx_kernel(*refs, inv_batch, has_vx):
    """Fused CE (+ optional -sum(v_bar * theta)) loss.

    refs layout:
      has_vx : (logits_ref, tgt_ref, vtheta_hbm, out_ref, acc_ref, slab_ref, dma_sem)
      else   : (logits_ref, tgt_ref, out_ref, acc_ref)
    """
    if has_vx:
        logits_ref, tgt_ref, vtheta_ref, out_ref, acc_ref, slab_ref, dma_sem = refs
    else:
        logits_ref, tgt_ref, out_ref, acc_ref = refs

    c = pl.program_id(0)               # parallel partition (per-core partial)
    i = pl.program_id(1)               # sequential reduction over batch tiles
    last = pl.num_programs(1) - 1

    @pl.when(i == 0)
    def _init():
        acc_ref[...] = jnp.zeros_like(acc_ref)

    if has_vx:
        # Prefetch the packed (v_bar, theta) slabs once; overlapped with the CE
        # compute of this partition.  Only partition 0 owns the vx term.
        @pl.when((i == 0) & (c == 0))
        def _start_slab_dma():
            pltpu.make_async_copy(vtheta_ref, slab_ref, dma_sem).start()

    # ---- per-batch-tile cross-entropy, kept per-row (no per-step XLU pass) --
    logits = logits_ref[...].astype(jnp.float32)                    # [tb, C]
    idx = tgt_ref[...]                                              # [tb, 1] int32
    col = jax.lax.broadcasted_iota(jnp.int32, logits.shape, 1)
    onehot_mask = col == idx                                        # [tb, C]

    m = jnp.max(logits, axis=-1, keepdims=True)                     # [tb, 1]
    lse = jnp.log(jnp.sum(jnp.exp(logits - m), axis=-1, keepdims=True)) + m
    tgt_logit = jnp.sum(jnp.where(onehot_mask, logits, 0.0),
                        axis=-1, keepdims=True)                     # masked "gather"
    acc_ref[...] += lse - tgt_logit                                 # [tb, 1]

    # ---- finalize this partition: one reduction, one lane-dense store -------
    @pl.when(i == last)
    def _finalize():
        ce = jnp.sum(acc_ref[...], axis=0, keepdims=True) * jnp.float32(inv_batch)
        out_ref[...] = jnp.broadcast_to(ce.reshape(1, 1, 1), out_ref.shape)

    if has_vx:
        @pl.when((i == last) & (c == 0))
        def _vx():
            pltpu.make_async_copy(vtheta_ref, slab_ref, dma_sem).wait()
            prod = slab_ref[0] * slab_ref[1]                        # [rows, 128]
            vx = jnp.sum(jnp.sum(prod, axis=1, keepdims=True),
                         axis=0, keepdims=True)                     # (1, 1)
            out_ref[...] = out_ref[...] - jnp.broadcast_to(
                vx.reshape(1, 1, 1), out_ref.shape)


def _choose_batch_tile(batch, per_row_bytes, budget_bytes, max_tile_rows=None):
    """Largest batch tile (== batch, or a multiple-of-8 divisor) within budget."""
    max_rows = max(budget_bytes // per_row_bytes, _SUBLANE)
    if max_tile_rows is not None:
        max_rows = min(max_rows, max_tile_rows)
    if batch <= max_rows:
        return batch
    best = None
    tb = _SUBLANE
    while tb <= max_rows:
        if batch % tb == 0:
            best = tb
        tb += _SUBLANE
    # Fallback: no suitable divisor -> single tile (keeps B % tb == 0 exact).
    return best if best is not None else batch


def custom_cross_entropy(output, target, *, vx_term=False, dataset="peaks",
                         weights=None, biases=None, v_w=None, v_b=None,
                         max_tile_rows=None):
    """Pallas forward of CustomCrossEntropy.

    output  : [B, C] logits (f32 or bf16; bf16 is NOT upcast before the kernel)
    target  : [B, C] one-hot coded ('peaks') or [B] int class indices (other)
    weights/biases : per-layer parameters (torch nn.Linear layout is fine)
    v_w/v_b        : matching v_bar tensors (already selected for the level)
    """
    logits = jnp.asarray(output)
    batch, num_classes = logits.shape

    # --- targets as int32 class indices (no [B, C] one-hot materialization) --
    if dataset == "peaks":
        # torch: (target == 1).nonzero()[:, -1]  == index of the single 1 per row.
        tgt_idx = jnp.argmax(jnp.asarray(target), axis=-1).astype(jnp.int32)
    else:
        tgt_idx = jnp.asarray(target, jnp.int32).reshape(-1)
    tgt_idx = tgt_idx.reshape(batch, 1)

    # --- pack all (v_bar, theta) tensors into two lane-dense 128-wide slabs --
    has_vx = bool(vx_term) and weights is not None and len(weights) > 0
    vtheta = None
    slab_rows = 0
    if has_vx:
        v_parts, t_parts = [], []
        for w, b, vw, vb in zip(weights, biases, v_w, v_b):
            v_parts += [jnp.asarray(vw, jnp.float32).reshape(-1),
                        jnp.asarray(vb, jnp.float32).reshape(-1)]
            t_parts += [jnp.asarray(w, jnp.float32).reshape(-1),
                        jnp.asarray(b, jnp.float32).reshape(-1)]
        v_flat = jnp.concatenate(v_parts)
        t_flat = jnp.concatenate(t_parts)
        total = v_flat.shape[0]
        rows = (total + _LANE - 1) // _LANE
        rows = ((rows + _SUBLANE - 1) // _SUBLANE) * _SUBLANE
        slab_rows = rows
        padded = rows * _LANE
        v_slab = jnp.zeros((padded,), jnp.float32).at[:total].set(v_flat)
        t_slab = jnp.zeros((padded,), jnp.float32).at[:total].set(t_flat)
        vtheta = jnp.stack([v_slab.reshape(rows, _LANE),
                            t_slab.reshape(rows, _LANE)])            # (2, rows, 128)

    # --- byte-budgeted batch tile (lane-padding aware) ------------------------
    c_pad = ((num_classes + _LANE - 1) // _LANE) * _LANE
    itemsize = jnp.dtype(logits.dtype).itemsize
    # padded VMEM bytes per batch row: logits (2 bufs) + int32 idx (2 bufs) + f32 acc
    per_row = 2 * c_pad * itemsize + 2 * _LANE * 4 + _LANE * 4
    tile_budget = 12 * 1024 * 1024
    tb = _choose_batch_tile(batch, per_row, tile_budget, max_tile_rows)
    assert batch % tb == 0, "batch tile must divide batch (mean normalization)"
    n_tiles = batch // tb
    # 2-way split over the parallel axis -> per-core partials on v7x megacore.
    n_par = 2 if (n_tiles >= 2 and n_tiles % 2 == 0) else 1
    n_steps = n_tiles // n_par

    vmem_bytes = tb * per_row + (2 * slab_rows * _LANE * 4 if has_vx else 0)
    vmem_limit = int(min(max(vmem_bytes + (4 << 20), 16 << 20), 32 << 20))

    def _batch_map(c, i):
        return (c * n_steps + i, 0)

    in_specs = [
        pl.BlockSpec((tb, num_classes), _batch_map),   # logits batch tile
        pl.BlockSpec((tb, 1), _batch_map),             # int32 class-index tile
    ]
    args = [logits, tgt_idx]
    scratch_shapes = [pltpu.VMEM((tb, 1), jnp.float32)]        # per-row CE accumulator
    if has_vx:
        # Slabs stay in HBM (no double-buffered VMEM copies); single DMA into scratch.
        in_specs.append(pl.BlockSpec(memory_space=pl.ANY))
        args.append(vtheta)
        scratch_shapes.append(pltpu.VMEM((2, slab_rows, _LANE), jnp.float32))
        scratch_shapes.append(pltpu.SemaphoreType.DMA(()))

    kernel = functools.partial(_ce_vx_kernel, inv_batch=1.0 / batch, has_vx=has_vx)

    out = pl.pallas_call(
        kernel,
        out_shape=jax.ShapeDtypeStruct((n_par, 1, _LANE), jnp.float32),
        grid=(n_par, n_steps),
        in_specs=in_specs,
        out_specs=pl.BlockSpec((1, 1, _LANE), lambda c, i: (c, 0, 0)),
        scratch_shapes=scratch_shapes,
        compiler_params=pltpu.CompilerParams(
            dimension_semantics=("parallel", "arbitrary"),
            vmem_limit_bytes=vmem_limit),
    )(*args)

    # Partition 0 already carries the -v^T*theta term; summing partials = loss.
    return jnp.sum(out[:, 0, 0])


if __name__ == "__main__":
    # Small shapes consistent with the module: logits from a 3-layer MLP head
    # over flattened 4x16x16 inputs (1024 features -> 32 -> 32 -> 10 classes).
    batch = 24
    num_classes = 10
    num_layers = 3
    num_features = 4 * 16 * 16      # 1024
    num_hidden = 32

    key = jax.random.PRNGKey(0)
    key, k_out, k_tgt = jax.random.split(key, 3)

    logits = jax.random.normal(k_out, (batch, num_classes), jnp.float32)
    classes = jax.random.randint(k_tgt, (batch,), 0, num_classes)
    target_onehot = jax.nn.one_hot(classes, num_classes, dtype=jnp.float32)

    # Per-layer parameters (torch Linear layout [out, in]) and v_bar grads.
    dims = [num_features] + [num_hidden] * (num_layers - 1) + [num_classes]
    weights, biases, v_w, v_b = [], [], [], []
    for l in range(num_layers):
        fan_in, fan_out = dims[l], dims[l + 1]
        key, kw, kb, kvw, kvb = jax.random.split(key, 5)
        weights.append(jax.random.normal(kw, (fan_out, fan_in), jnp.float32) * 0.05)
        biases.append(jax.random.normal(kb, (fan_out,), jnp.float32) * 0.05)
        v_w.append(jax.random.normal(kvw, (fan_out, fan_in), jnp.float32) * 0.05)
        v_b.append(jax.random.normal(kvb, (fan_out,), jnp.float32) * 0.05)

    # --- Pallas forward (both branches of the module) -----------------------
    loss_plain = custom_cross_entropy(logits, target_onehot,
                                      vx_term=False, dataset="peaks")
    loss_vx = custom_cross_entropy(logits, target_onehot,
                                   vx_term=True, dataset="peaks",
                                   weights=weights, biases=biases,
                                   v_w=v_w, v_b=v_b)
    loss_plain = jax.block_until_ready(loss_plain)
    loss_vx = jax.block_until_ready(loss_vx)

    # --- pure-JAX reference (mirrors the torch module exactly) --------------
    lse = jax.scipy.special.logsumexp(logits, axis=-1)
    tgt_logit = jnp.take_along_axis(logits, classes[:, None], axis=-1)[:, 0]
    ce_ref = jnp.mean(lse - tgt_logit)
    vx_ref = 0.0
    for l in range(num_layers):
        vx_ref = vx_ref + jnp.sum(v_w[l] * weights[l]) + jnp.sum(v_b[l] * biases[l])

    assert jnp.allclose(loss_plain, ce_ref, atol=1e-4, rtol=1e-4), (loss_plain, ce_ref)
    assert jnp.allclose(loss_vx, ce_ref - vx_ref, atol=1e-4, rtol=1e-4), (
        loss_vx, ce_ref - vx_ref)

    # --- also exercise the multi-tile + 2-way parallel-partition path -------
    batch2 = 64
    key, k_out2, k_tgt2 = jax.random.split(key, 3)
    logits2 = jax.random.normal(k_out2, (batch2, num_classes), jnp.float32)
    classes2 = jax.random.randint(k_tgt2, (batch2,), 0, num_classes)
    onehot2 = jax.nn.one_hot(classes2, num_classes, dtype=jnp.float32)
    loss2 = custom_cross_entropy(logits2, onehot2, vx_term=True, dataset="peaks",
                                 weights=weights, biases=biases, v_w=v_w, v_b=v_b,
                                 max_tile_rows=16)   # force 4 tiles -> grid (2, 2)
    loss2 = jax.block_until_ready(loss2)
    lse2 = jax.scipy.special.logsumexp(logits2, axis=-1)
    tl2 = jnp.take_along_axis(logits2, classes2[:, None], axis=-1)[:, 0]
    ref2 = jnp.mean(lse2 - tl2) - vx_ref
    assert jnp.allclose(loss2, ref2, atol=1e-4, rtol=1e-4), (loss2, ref2)

    print("KERNEL_OK")
</pallas_src>

<mosaic_0001>
module attributes {stable_mosaic.version = 11 : i64} {
  func.func @_ce_vx_kernel(%arg0: i32, %arg1: i32, %arg2: memref<24x10xf32, #tpu.memory_space<vmem>>, %arg3: memref<24x1xi32, #tpu.memory_space<vmem>>, %arg4: memref<1x1x128xf32, #tpu.memory_space<vmem>>, %arg5: memref<24x1xf32, #tpu.memory_space<vmem>>) attributes {dimension_semantics = [#tpu.dimension_semantics<parallel>, #tpu.dimension_semantics<arbitrary>], iteration_bounds = array<i64: 1, 1>, scalar_prefetch = 0 : i64, scratch_operands = 1 : i64, tpu.core_type = #tpu.core_type<tc>, window_params = [{transform_indices = @transform_0, window_bounds = array<i64: 24, 10>}, {transform_indices = @transform_1, window_bounds = array<i64: 24, 1>}, {transform_indices = @transform_2, window_bounds = array<i64: 1, 1, 128>}]} {
    %c0_i32 = arith.constant 0 : i32
    %0 = arith.cmpi eq, %arg1, %c0_i32 : i32
    %1 = arith.extui %0 : i1 to i32
    %c0_i32_0 = arith.constant 0 : i32
    %2 = arith.cmpi ne, %1, %c0_i32_0 : i32
    scf.if %2 {
      %cst_13 = arith.constant 0.000000e+00 : f32
      %28 = vector.broadcast %cst_13 : f32 to vector<24x1xf32>
      %c0_14 = arith.constant 0 : index
      %c0_15 = arith.constant 0 : index
      %29 = vector.load %arg5[%c0_14, %c0_15] : memref<24x1xf32, #tpu.memory_space<vmem>>, vector<24x1xf32>
      tpu.vector_store %arg5[%c0_14, %c0_15], %28 {strides = array<i32>} : memref<24x1xf32, #tpu.memory_space<vmem>>, vector<24x1xf32>,
    } else {
    }
    %c0 = arith.constant 0 : index
    %c0_1 = arith.constant 0 : index
    %3 = vector.load %arg2[%c0, %c0_1] : memref<24x10xf32, #tpu.memory_space<vmem>>, vector<24x10xf32>
    %c0_2 = arith.constant 0 : index
    %c0_3 = arith.constant 0 : index
    %4 = vector.load %arg3[%c0_2, %c0_3] : memref<24x1xi32, #tpu.memory_space<vmem>>, vector<24x1xi32>
    %5 = tpu.iota {dimensions = array<i32: 1>} : vector<24x10xi32>
    %6 = vector.broadcast %4 : vector<24x1xi32> to vector<24x10xi32>
    %7 = arith.cmpi eq, %5, %6 : vector<24x10xi32>
    %cst = arith.constant dense<0xFF800000> : vector<24xf32>
    %8 = vector.multi_reduction <maximumf>, %3, %cst [1] : vector<24x10xf32> to vector<24xf32>
    %9 = vector.shape_cast %8 : vector<24xf32> to vector<24x1xf32>
    %10 = vector.broadcast %9 : vector<24x1xf32> to vector<24x10xf32>
    %11 = arith.subf %3, %10 : vector<24x10xf32>
    %12 = math.exp %11 : vector<24x10xf32>
    %cst_4 = arith.constant dense<0.000000e+00> : vector<24xf32>
    %13 = vector.multi_reduction <add>, %12, %cst_4 [1] : vector<24x10xf32> to vector<24xf32>
    %14 = vector.shape_cast %13 : vector<24xf32> to vector<24x1xf32>
    %15 = math.log %14 : vector<24x1xf32>
    %16 = arith.addf %15, %9 : vector<24x1xf32>
    %cst_5 = arith.constant 0.000000e+00 : f32
    %17 = vector.broadcast %cst_5 : f32 to vector<24x10xf32>
    %18 = arith.select %7, %3, %17 : vector<24x10xi1>, vector<24x10xf32>
    %cst_6 = arith.constant dense<0.000000e+00> : vector<24xf32>
    %19 = vector.multi_reduction <add>, %18, %cst_6 [1] : vector<24x10xf32> to vector<24xf32>
    %20 = vector.shape_cast %19 : vector<24xf32> to vector<24x1xf32>
    %c0_7 = arith.constant 0 : index
    %c0_8 = arith.constant 0 : index
    %21 = vector.load %arg5[%c0_7, %c0_8] : memref<24x1xf32, #tpu.memory_space<vmem>>, vector<24x1xf32>
    %22 = arith.subf %16, %20 : vector<24x1xf32>
    %23 = arith.addf %21, %22 : vector<24x1xf32>
    %c0_9 = arith.constant 0 : index
    %c0_10 = arith.constant 0 : index
    %24 = vector.load %arg5[%c0_9, %c0_10] : memref<24x1xf32, #tpu.memory_space<vmem>>, vector<24x1xf32>
    tpu.vector_store %arg5[%c0_9, %c0_10], %23 {strides = array<i32>} : memref<24x1xf32, #tpu.memory_space<vmem>>, vector<24x1xf32>,
    %c0_i32_11 = arith.constant 0 : i32
    %25 = arith.cmpi eq, %arg1, %c0_i32_11 : i32
    %26 = arith.extui %25 : i1 to i32
    %c0_i32_12 = arith.constant 0 : i32
    %27 = arith.cmpi ne, %26, %c0_i32_12 : i32
    scf.if %27 {
      %c0_13 = arith.constant 0 : index
      %c0_14 = arith.constant 0 : index
      %28 = vector.load %arg5[%c0_13, %c0_14] : memref<24x1xf32, #tpu.memory_space<vmem>>, vector<24x1xf32>
      %cst_15 = arith.constant dense<0.000000e+00> : vector<1xf32>
      %29 = vector.multi_reduction <add>, %28, %cst_15 [0] : vector<24x1xf32> to vector<1xf32>
      %30 = vector.shape_cast %29 : vector<1xf32> to vector<1x1xf32>
      %cst_16 = arith.constant 0.0416666679 : f32
      %31 = vector.broadcast %cst_16 : f32 to vector<1x1xf32>
      %32 = arith.mulf %30, %31 : vector<1x1xf32>
      %33 = vector.shape_cast %32 : vector<1x1xf32> to vector<1x1x1xf32>
      %34 = vector.shape_cast %33 : vector<1x1x1xf32> to vector<1x1x1xf32>
      %35 = vector.broadcast %34 : vector<1x1x1xf32> to vector<1x1x128xf32>
      %c0_17 = arith.constant 0 : index
      %c0_18 = arith.constant 0 : index
      %c0_19 = arith.constant 0 : index
      %36 = vector.load %arg4[%c0_17, %c0_18, %c0_19] : memref<1x1x128xf32, #tpu.memory_space<vmem>>, vector<1x1x128xf32>
      tpu.vector_store %arg4[%c0_17, %c0_18, %c0_19], %35 {strides = array<i32>} : memref<1x1x128xf32, #tpu.memory_space<vmem>>, vector<1x1x128xf32>,
    } else {
    }
    return
  }
  func.func @transform_0(%arg0: i32, %arg1: i32) -> (i32, i32) {
    %c1_i32 = arith.constant 1 : i32
    %0 = arith.muli %arg0, %c1_i32 : i32
    %1 = arith.addi %0, %arg1 : i32
    %c0_i32 = arith.constant 0 : i32
    %c0_i32_0 = arith.constant 0 : i32
    return %1, %c0_i32 : i32, i32
  }
  func.func @transform_1(%arg0: i32, %arg1: i32) -> (i32, i32) {
    %c1_i32 = arith.constant 1 : i32
    %0 = arith.muli %arg0, %c1_i32 : i32
    %1 = arith.addi %0, %arg1 : i32
    %c0_i32 = arith.constant 0 : i32
    %c0_i32_0 = arith.constant 0 : i32
    return %1, %c0_i32 : i32, i32
  }
  func.func @transform_2(%arg0: i32, %arg1: i32) -> (i32, i32, i32) {
    %c0_i32 = arith.constant 0 : i32
    %c0_i32_0 = arith.constant 0 : i32
    %c0_i32_1 = arith.constant 0 : i32
    return %arg0, %c0_i32, %c0_i32_0 : i32, i32, i32
  }
}

</mosaic_0001>

<llo_original>
// kernel: tpu_custom_call.1
$region0: #{tpu_custom_call.1}
  #allocation0 [shape = 'u32[]', space=smem, size = 0x4, offset = 0x4, fixed_abs, tag = 'smem constant byte address 0x4 - core index']
  #allocation1 [shape = 'u32[144,128]{1,0:T(1,128)}', space=vmem, size = 0x12000, scoped, tag = 'internal scratch']
  #allocation2 [shape = 'f32[24,1]{1,0:T(8,128)}', space=vmem, size = 0x3000, scoped, tag = 'scratch operand']
  %s0 = inlined_call_operand.vmem [shape: f32[24,10], index: 0, kind: input, shape index: {}]
  %s1 = inlined_call_operand.vmem [shape: s32[24,1], index: 1, kind: input, shape index: {}]
  %s2 = inlined_call_operand.hbm [shape: f32[1,1,128], index: 2, kind: output, shape index: {}]
  %s3 = sld [smem:[#allocation0]]
  $region26: #{tpu_custom_call.1} parent=0
    _
  %s5 = ssub.s32 1, %s3
  %s6 = scalar_select 0, %s5, %s3
  $region1: #{tpu_custom_call.1} parent=0
    #allocation3 [shape = 'u8[512]{0}', space=vmem, size = 0x400, scoped, tag = 'output window, operand 0, single buffered']
    #allocation4 [shape = 's32[1]{0}', space=sflag, size = 0x4, scoped, tag = 'scoped memory for tpu_custom_call.1']
    %7 = vsyncpa [#allocation4], 0
    // Predicated region
    $region2: #{tpu_custom_call.1} parent=1 // pred_check
      _
    $region3: #{tpu_custom_call.1} parent=1 // pred_check_branch
      %9 = sbr.rel (0) target = $region5
    $region4: #{tpu_custom_call.1} parent=1 // pred_region
      %s10 = sadd.s32 0, 0
      %s11 = smul.u32 3, %s10
      %p12 = scmp.lt.s32.totalorder %s11, 2
      %s13 = scalar_select %p12, %s11, 2
      %s14 = smul.addr %s13, 8
      %s15 = scalar_lea.vmem %s0, %s14
      %s16 = sadd.s32 0, 0
      %s17 = smul.u32 3, %s16
    $region5: #{tpu_custom_call.1} parent=1 // pred_fallthru
      _
    // Predicated region
    $region6: #{tpu_custom_call.1} parent=1 // pred_check
      _
    $region7: #{tpu_custom_call.1} parent=1 // pred_check_branch
      %19 = sbr.rel (0) target = $region9
    $region8: #{tpu_custom_call.1} parent=1 // pred_region
      %s20 = sadd.s32 0, 0
      %s21 = smul.u32 3, %s20
      %p22 = scmp.lt.s32.totalorder %s21, 2
      %s23 = scalar_select %p22, %s21, 2
      %s24 = smul.addr %s23, 8
      %s25 = scalar_lea.vmem %s1, %s24
      %s26 = sadd.s32 0, 0
      %s27 = smul.u32 3, %s26
    $region9: #{tpu_custom_call.1} parent=1 // pred_fallthru
      _
    %s28 = sadd.s32 0, 0
    %s29 = smul.u32 3, %s28
    %p30 = scmp.lt.s32.totalorder %s29, 2
    %s31 = scalar_select %p30, %s29, 2
    %s32 = smul.addr %s31, 8
    %s33 = scalar_lea.vmem %s0, %s32
    %s34 = sadd.s32 0, 0
    %s35 = smul.u32 3, %s34
    %p36 = scmp.lt.s32.totalorder %s35, 2
    %s37 = scalar_select %p36, %s35, 2
    %s38 = smul.addr %s37, 8
    %s39 = scalar_lea.vmem %s1, %s38
    %s40 = sadd.s32 0, 0
    %s41 = smul.u32 3, %s40
    %p42 = scmp.lt.s32.totalorder %s41, 2
    %s43 = scalar_select %p42, %s41, 2
    %s44 = smul.addr %s43, 8
    %s45 = scalar_lea.vmem %s0, %s44
    %s46 = sadd.s32 0, 0
    %s47 = smul.u32 3, %s46
    %s48 = sadd.s32 0, 0
    %s49 = smul.u32 3, %s48
    %p50 = scmp.lt.s32.totalorder %s49, 2
    %s51 = scalar_select %p50, %s49, 2
    %s52 = smul.addr %s51, 8
    %s53 = scalar_lea.vmem %s1, %s52
    %s54 = sadd.s32 0, 0
    %s55 = smul.u32 3, %s54
    %p56 = scmp.eq.s32.totalorder 0, 0
    // Predicated region
    $region10: #{tpu_custom_call.1} parent=1 // pred_check
      %p57 = pneg %p56
    $region11: #{tpu_custom_call.1} parent=1 // pred_check_branch
      %59 = sbr.rel (%p57) target = $region13
    $region12: #{tpu_custom_call.1} parent=1 // pred_region
      %vm60 = vcmask 7168
      %61 = vst.msk [vmem:[#allocation2] sm:$0xff] %vm60, 0.0
      %62 = vst.msk [vmem:[#allocation2 + $0x8] sm:$0xff] %vm60, 0.0
      %63 = vst.msk [vmem:[#allocation2 + $0x10] sm:$0xff] %vm60, 0.0
    $region13: #{tpu_custom_call.1} parent=1 // pred_fallthru
      _
    %v64 = vld [vmem:[%s45] sm:$0xff]
    %v65 = vld [vmem:[%s45 + $0x8] sm:$0xff]
    %v66 = vld [vmem:[%s45 + $0x10] sm:$0xff]
    %v67 = vld [vmem:[%s53] sm:$0xff]
    %v68 = vld [vmem:[%s53 + $0x8] sm:$0xff]
    %v69 = vld [vmem:[%s53 + $0x10] sm:$0xff]
    %v70 = vlaneseq
    %v71 = vand.u32 %v70, 127
    %72 = vset.pattern.permute.xlu0 0
    %73 = vperm.xlu0 %72, %v67
    %v74 = vpop.permute.xlu0 %73
    %75 = vset.pattern.permute.xlu0 0
    %76 = vperm.xlu0 %75, %v68
    %v77 = vpop.permute.xlu0 %76
    %78 = vset.pattern.permute.xlu0 0
    %79 = vperm.xlu0 %78, %v69
    %v80 = vpop.permute.xlu0 %79
    %vm81 = vcmp.eq.s32.totalorder %v71, %v74
    %vm82 = vcmp.eq.s32.totalorder %v71, %v77
    %vm83 = vcmp.eq.s32.totalorder %v71, %v80
    %vm84 = vcmask 80896
    %v85 = vsel %vm84, %v64, -inf
    %86 = vmax.xlane.f32.xlu0 %v85
    %v87 = vpop.xlane.xlu0 %86
    %v88 = vsel %vm84, %v65, -inf
    %89 = vmax.xlane.f32.xlu0 %v88
    %v90 = vpop.xlane.xlu0 %89
    %v91 = vsel %vm84, %v66, -inf
    %92 = vmax.xlane.f32.xlu0 %v91
    %v93 = vpop.xlane.xlu0 %92
    %v94 = vsub.f32 %v64, %v87
    %v95 = vsub.f32 %v65, %v90
    %v96 = vsub.f32 %v66, %v93
    %v97 = vmul.f32 %v94, 1.442695
    %v98 = vpow.pop %v97
    %v99 = vmul.f32 %v95, 1.442695
    %v100 = vpow.pop %v99
    %v101 = vmul.f32 %v96, 1.442695
    %v102 = vpow.pop %v101
    %v103 = vsel %vm84, %v98, 0.0
    %104 = vadd.xlane.f32.xlu0 %v103
    %v105 = vpop.xlane.xlu0 %104
    %v106 = vsel %vm84, %v100, 0.0
    %107 = vadd.xlane.f32.xlu0 %v106
    %v108 = vpop.xlane.xlu0 %107
    %v109 = vsel %vm84, %v102, 0.0
    %110 = vadd.xlane.f32.xlu0 %v109
    %v111 = vpop.xlane.xlu0 %110
    %v112 = vlog2.pop %v105
    %v113 = vmul.f32 %v112, 0.6931472
    %v114 = vlog2.pop %v108
    %v115 = vmul.f32 %v114, 0.6931472
    %v116 = vlog2.pop %v111
    %v117 = vmul.f32 %v116, 0.6931472
    %v118 = vadd.f32 %v113, %v87
    %v119 = vadd.f32 %v115, %v90
    %v120 = vadd.f32 %v117, %v93
    %v121 = vsel %vm81, %v64, 0.0
    %v122 = vsel %vm82, %v65, 0.0
    %v123 = vsel %vm83, %v66, 0.0
    %v124 = vsel %vm84, %v121, 0.0
    %125 = vadd.xlane.f32.xlu0 %v124
    %v126 = vpop.xlane.xlu0 %125
    %v127 = vsel %vm84, %v122, 0.0
    %128 = vadd.xlane.f32.xlu0 %v127
    %v129 = vpop.xlane.xlu0 %128
    %v130 = vsel %vm84, %v123, 0.0
    %131 = vadd.xlane.f32.xlu0 %v130
    %v132 = vpop.xlane.xlu0 %131
    %v133 = vld [vmem:[#allocation2] sm:$0xff]
    %v134 = vld [vmem:[#allocation2 + $0x8] sm:$0xff]
    %v135 = vld [vmem:[#allocation2 + $0x10] sm:$0xff]
    %v136 = vsub.f32 %v118, %v126
    %v137 = vsub.f32 %v119, %v129
    %v138 = vsub.f32 %v120, %v132
    %v139 = vadd.f32 %v133, %v136
    %v140 = vadd.f32 %v134, %v137
    %v141 = vadd.f32 %v135, %v138
    %vm142 = vcmask 7168
    %143 = vst.msk [vmem:[#allocation2] sm:$0xff] %vm142, %v139
    %144 = vst.msk [vmem:[#allocation2 + $0x8] sm:$0xff] %vm142, %v140
    %145 = vst.msk [vmem:[#allocation2 + $0x10] sm:$0xff] %vm142, %v141
    // Predicated region
    $region14: #{tpu_custom_call.1} parent=1 // pred_check
      %p146 = pneg %p56
    $region15: #{tpu_custom_call.1} parent=1 // pred_check_branch
      %148 = sbr.rel (%p146) target = $region17
    $region16: #{tpu_custom_call.1} parent=1 // pred_region
      %v149 = vld [vmem:[#allocation2] sm:$0xff]
      %v150 = vld [vmem:[#allocation2 + $0x8] sm:$0xff]
      %v151 = vld [vmem:[#allocation2 + $0x10] sm:$0xff]
      %v152 = vsel %vm142, %v149, 0.0
      %v153 = vsel %vm142, %v150, 0.0
      %v154 = vadd.f32 %v152, %v153
      %v155 = vsel %vm142, %v151, 0.0
      %v156 = vadd.f32 %v154, %v155
      %v157 = vrot.slane %v156, 4
      %v158 = vadd.f32 %v156, %v157
      %v159 = vrot.slane %v158, 2
      %v160 = vadd.f32 %v158, %v159
      %v161 = vrot.slane %v160, 1
      %v162 = vadd.f32 %v160, %v161
      %v163 = vmul.f32 %v162, 0.041666668
      %165 = vset.pattern.permute.xlu0 0
      %166 = vperm.xlu0 %165, %v163
      %v167 = vpop.permute.xlu0 %166
      %169 = vst [vmem:[#allocation3] sm:$0x1] %v167
    $region17: #{tpu_custom_call.1} parent=1 // pred_fallthru
      _
    // Predicated region
    $region18: #{tpu_custom_call.1} parent=1 // pred_check
      _
    $region19: #{tpu_custom_call.1} parent=1 // pred_check_branch
      %171 = sbr.rel (0) target = $region21
    $region20: #{tpu_custom_call.1} parent=1 // pred_region
      %s173 = ssub.s32 16, 16
      %174 = vsyncadd [#allocation4], %s173
      %s176 = sshll.u32 [#allocation3], 4
      %s177 = int_to_ptr.vmem [resolvable:$true] %s176
      %179 = dma.vmem_to_hbm [thread:$0]  %s177, 16, %s2, [#allocation4]
    $region21: #{tpu_custom_call.1} parent=1 // pred_fallthru
      _
    // Predicated region
    $region22: #{tpu_custom_call.1} parent=1 // pred_check
      _
    $region23: #{tpu_custom_call.1} parent=1 // pred_check_branch
      %181 = sbr.rel (0) target = $region25
    $region24: #{tpu_custom_call.1} parent=1 // pred_region
      %182 = dma.done [#allocation4], 16
    $region25: #{tpu_custom_call.1} parent=1 // pred_fallthru
      _
    %183 = vsyncpa [#allocation4], 1

</llo_original>
